<compile_context>
chip_gen: v7x
topology: tpu7x:2x2x1
jax: 0.10.0
libtpu: 0.0.40
codegen_flags: <defaults>
</compile_context>

<pallas_src>
import jax
import jax.numpy as jnp
from jax.experimental import pallas as pl
from jax.experimental.pallas import tpu as pltpu

# ---- model hyper-params (small, consistent with the module's __init__) ----
NUM_FRAMES = 8          # lfd_params.model.iad_frames
NUM_FEATURES = 32       # lfd_params.model.original_size
NUM_LABELS = 4          # len(lfd_params.application.obs_label_list)
HISTORY = 2             # batch / history length

LANE = 128              # f32 lane width
SUBLANE = 8             # f32 sublane minimum


def _round_up(x, m):
    return (x + m - 1) // m * m


def _spatial_linear_kernel(x_ref, w_ref, b_ref, o_ref):
    """o[h, l] = sum_k x[h, k] * w[k, l] + b[l]   (natural MXU orientation)."""
    acc = jnp.dot(x_ref[...], w_ref[...], preferred_element_type=jnp.float32)
    o_ref[...] = (acc + b_ref[...]).astype(o_ref.dtype)


def spatial_linear(x_flat, w_pad, b_pad, num_labels):
    """x_flat: (H, K) f32, w_pad: (K, L_pad), b_pad: (1, L_pad) -> (H, num_labels).

    Small H (<= 8): one full-array block, single grid step, zero padding work.
    Large H: 512-row (or H/2-row) tiles over a "parallel" grid so the serial
    TCs (v5e/v6e) amortize step overhead and v7x's two TCs both get blocks.
    """
    H, K = x_flat.shape
    Kw, L_pad = w_pad.shape
    assert Kw == K

    if H <= SUBLANE:
        # Full-array block: block_shape equal to the array dims is legal even
        # when H < 8; nothing to pipeline at this size.
        tile_h, grid = H, (1,)
        x_in, H_pad = x_flat, H
    else:
        # >= 2 parallel steps (v7x core balance), big tiles (step-overhead
        # amortization), sublane-aligned.
        tile_h = min(512, _round_up(pl.cdiv(H, 2), SUBLANE))
        H_pad = _round_up(H, tile_h)
        grid = (H_pad // tile_h,)
        x_in = x_flat if H_pad == H else jnp.pad(
            x_flat, ((0, H_pad - H), (0, 0)))

    out = pl.pallas_call(
        _spatial_linear_kernel,
        out_shape=jax.ShapeDtypeStruct((H_pad, L_pad), jnp.float32),
        grid=grid,
        in_specs=[
            pl.BlockSpec((tile_h, K), lambda i: (i, 0)),   # x row-tile
            pl.BlockSpec((K, L_pad), lambda i: (0, 0)),    # weight (resident)
            pl.BlockSpec((1, L_pad), lambda i: (0, 0)),    # bias   (resident)
        ],
        out_specs=pl.BlockSpec((tile_h, L_pad), lambda i: (i, 0)),
        compiler_params=pltpu.CompilerParams(
            dimension_semantics=("parallel",)),
    )(x_in, w_pad, b_pad)

    # drop padding: back to the module's (history, num_labels) shape
    return out[:H, :num_labels]


def classifier_forward(x, kernel_params):
    """Replicates Classifier.forward for use_spatial=True, suffix=LINEAR.

    x: (history, num_frames, num_features)  float32
    kernel_params: output of prepare_params() (padded, kernel-ready tensors).
    """
    history_length = x.shape[0]
    # x = x.view(history_length, -1, self.num_features)
    x = x.reshape(history_length, -1, NUM_FEATURES)
    # SpatialExtLinear with consensus='flat': flatten frames*features, Linear.
    x_flat = x.reshape(history_length, -1).astype(jnp.float32)  # (H, T*F)
    out = spatial_linear(x_flat, kernel_params["w_pad"],
                         kernel_params["b_pad"], kernel_params["num_labels"])
    # reshape_output=True -> (history, num_labels)
    return out.reshape(history_length, kernel_params["num_labels"])


def init_params(key):
    """Raw nn.Linear-style parameters (as the PyTorch module would hold)."""
    k_w, k_b = jax.random.split(key)
    in_size = NUM_FRAMES * NUM_FEATURES
    w = jax.random.normal(k_w, (in_size, NUM_LABELS), jnp.float32) * 0.02
    b = jax.random.normal(k_b, (NUM_LABELS,), jnp.float32) * 0.02
    return {"w": w, "b": b}


def prepare_params(params):
    """One-time (param-load-time) padding into the kernel-ready layout.

    Weight stays in (K, L) orientation -- only zero columns are appended to
    reach the lane-dense L_pad = 128; bias is a (1, L_pad) row vector.
    """
    w = params["w"].astype(jnp.float32)
    b = params["b"].reshape(1, -1).astype(jnp.float32)
    K, L = w.shape
    L_pad = _round_up(L, LANE)
    w_pad = jnp.pad(w, ((0, 0), (0, L_pad - L)))
    b_pad = jnp.pad(b, ((0, 0), (0, L_pad - L)))
    return {"w_pad": jax.device_put(w_pad),
            "b_pad": jax.device_put(b_pad),
            "num_labels": L}


if __name__ == "__main__":
    key = jax.random.PRNGKey(0)
    k_x, k_p, k_big, k_rag = jax.random.split(key, 4)
    params = init_params(k_p)
    kparams = prepare_params(params)          # hoisted weight/bias prep

    def reference(xin):
        return xin.reshape(xin.shape[0], -1) @ params["w"] + params["b"]

    # --- small shape consistent with the module (history=2): full-block path ---
    x = jax.random.normal(k_x, (HISTORY, NUM_FRAMES, NUM_FEATURES), jnp.float32)
    out = jax.block_until_ready(classifier_forward(x, kparams))
    assert out.shape == (HISTORY, NUM_LABELS)
    assert jnp.allclose(out, reference(x), atol=1e-4, rtol=1e-4)

    # --- large history: tiled "parallel" grid (2 x 512-row blocks) ---
    H_BIG = 1024
    x_big = jax.random.normal(
        k_big, (H_BIG, NUM_FRAMES, NUM_FEATURES), jnp.float32)
    out_big = jax.block_until_ready(classifier_forward(x_big, kparams))
    assert out_big.shape == (H_BIG, NUM_LABELS)
    assert jnp.allclose(out_big, reference(x_big), atol=1e-4, rtol=1e-4)

    # --- ragged history (not a multiple of the tile): jnp.pad remainder path ---
    H_RAG = 300
    x_rag = jax.random.normal(
        k_rag, (H_RAG, NUM_FRAMES, NUM_FEATURES), jnp.float32)
    out_rag = jax.block_until_ready(classifier_forward(x_rag, kparams))
    assert out_rag.shape == (H_RAG, NUM_LABELS)
    assert jnp.allclose(out_rag, reference(x_rag), atol=1e-4, rtol=1e-4)

    print("KERNEL_OK")
</pallas_src>

<mosaic_0001>
module attributes {stable_mosaic.version = 11 : i64} {
  func.func @_spatial_linear_kernel(%arg0: i32, %arg1: memref<2x256xf32, #tpu.memory_space<vmem>>, %arg2: memref<256x128xf32, #tpu.memory_space<vmem>>, %arg3: memref<1x128xf32, #tpu.memory_space<vmem>>, %arg4: memref<2x128xf32, #tpu.memory_space<vmem>>) attributes {dimension_semantics = [#tpu.dimension_semantics<parallel>], iteration_bounds = array<i64: 1>, scalar_prefetch = 0 : i64, scratch_operands = 0 : i64, tpu.core_type = #tpu.core_type<tc>, window_params = [{transform_indices = @transform_0, window_bounds = array<i64: 2, 256>}, {pipeline_mode = #tpu.pipeline_mode<synchronous>, transform_indices = @transform_1, window_bounds = array<i64: 256, 128>}, {pipeline_mode = #tpu.pipeline_mode<synchronous>, transform_indices = @transform_2, window_bounds = array<i64: 1, 128>}, {transform_indices = @transform_3, window_bounds = array<i64: 2, 128>}]} {
    %c0 = arith.constant 0 : index
    %c0_0 = arith.constant 0 : index
    %0 = vector.load %arg1[%c0, %c0_0] : memref<2x256xf32, #tpu.memory_space<vmem>>, vector<2x256xf32>
    %c0_1 = arith.constant 0 : index
    %c0_2 = arith.constant 0 : index
    %1 = vector.load %arg2[%c0_1, %c0_2] : memref<256x128xf32, #tpu.memory_space<vmem>>, vector<256x128xf32>
    %cst = arith.constant dense<0.000000e+00> : vector<2x128xf32>
    %2 = tpu.matmul %0, %1, %cst {dimension_numbers = #tpu.dot_dimension_numbers<[1], [0], [0], [1], [0, 0, 1, 1], [], []>} : vector<2x256xf32>, vector<256x128xf32>, vector<2x128xf32> -> vector<2x128xf32>
    %c0_3 = arith.constant 0 : index
    %c0_4 = arith.constant 0 : index
    %3 = vector.load %arg3[%c0_3, %c0_4] : memref<1x128xf32, #tpu.memory_space<vmem>>, vector<1x128xf32>
    %4 = vector.broadcast %3 : vector<1x128xf32> to vector<2x128xf32>
    %5 = arith.addf %2, %4 : vector<2x128xf32>
    %c0_5 = arith.constant 0 : index
    %c0_6 = arith.constant 0 : index
    %6 = vector.load %arg4[%c0_5, %c0_6] : memref<2x128xf32, #tpu.memory_space<vmem>>, vector<2x128xf32>
    tpu.vector_store %arg4[%c0_5, %c0_6], %5 {strides = array<i32>} : memref<2x128xf32, #tpu.memory_space<vmem>>, vector<2x128xf32>,
    return
  }
  func.func @transform_0(%arg0: i32) -> (i32, i32) {
    %c0_i32 = arith.constant 0 : i32
    %c0_i32_0 = arith.constant 0 : i32
    return %arg0, %c0_i32 : i32, i32
  }
  func.func @transform_1(%arg0: i32) -> (i32, i32) {
    %c0_i32 = arith.constant 0 : i32
    %c0_i32_0 = arith.constant 0 : i32
    %c0_i32_1 = arith.constant 0 : i32
    return %c0_i32, %c0_i32_0 : i32, i32
  }
  func.func @transform_2(%arg0: i32) -> (i32, i32) {
    %c0_i32 = arith.constant 0 : i32
    %c0_i32_0 = arith.constant 0 : i32
    %c0_i32_1 = arith.constant 0 : i32
    return %c0_i32, %c0_i32_0 : i32, i32
  }
  func.func @transform_3(%arg0: i32) -> (i32, i32) {
    %c0_i32 = arith.constant 0 : i32
    %c0_i32_0 = arith.constant 0 : i32
    return %arg0, %c0_i32 : i32, i32
  }
}

</mosaic_0001>

<llo_original>
// kernel: tpu_custom_call.1
$region0: #{tpu_custom_call.1}
  #allocation0 [shape = 'u32[]', space=smem, size = 0x4, offset = 0x4, fixed_abs, tag = 'smem constant byte address 0x4 - core index']
  #allocation1 [shape = 'u32[144,128]{1,0:T(1,128)}', space=vmem, size = 0x12000, scoped, tag = 'internal scratch']
  %s0 = inlined_call_operand.hbm [shape: f32[2,256], index: 0, kind: input, shape index: {}]
  %s1 = inlined_call_operand.hbm [shape: f32[256,128], index: 1, kind: input, shape index: {}]
  %s2 = inlined_call_operand.vmem [shape: f32[1,128], index: 2, kind: input, shape index: {}]
  %s3 = inlined_call_operand.hbm [shape: f32[2,128], index: 3, kind: output, shape index: {}]
  %s4 = sld [smem:[#allocation0]]
  $region30: #{tpu_custom_call.1} parent=0
    _
  %s6 = ssub.s32 1, %s4
  %s7 = scalar_select 0, %s6, %s4
  $region1: #{tpu_custom_call.1} parent=0
    #allocation2 [shape = 'u8[2048]{0}', space=vmem, size = 0x800, scoped, tag = 'input window, operand 0, single buffered']
    #allocation3 [shape = 's32[1]{0}', space=sflag, size = 0x4, scoped, tag = 'scoped memory for tpu_custom_call.1']
    #allocation4 [shape = 's32[1]{0}', space=sflag, size = 0x4, scoped, tag = 'scoped memory for tpu_custom_call.1']
    #allocation5 [shape = 'u8[131072]{0}', space=vmem, size = 0x20000, scoped, tag = 'input window, operand 1, single buffered']
    #allocation6 [shape = 's32[1]{0}', space=sflag, size = 0x4, scoped, tag = 'scoped memory for tpu_custom_call.1']
    #allocation7 [shape = 'u8[1024]{0}', space=vmem, size = 0x400, scoped, tag = 'output window, operand 0, single buffered']
    %8 = vsyncpa [#allocation3], 0
    %9 = vsyncpa [#allocation6], 0
    %10 = vsyncpa [#allocation4], 0
    // Predicated region
    $region2: #{tpu_custom_call.1} parent=1 // pred_check
      _
    $region3: #{tpu_custom_call.1} parent=1 // pred_check_branch
      %12 = sbr.rel (0) target = $region5
    $region4: #{tpu_custom_call.1} parent=1 // pred_region
      %s14 = ssub.s32 64, 64
      %15 = vsyncadd [#allocation3], %s14
      %s17 = sshll.u32 [#allocation2], 4
      %s18 = int_to_ptr.vmem [resolvable:$true] %s17
      %20 = dma.hbm_to_vmem [thread:$0]  %s0, 64, %s18, [#allocation3]
    $region5: #{tpu_custom_call.1} parent=1 // pred_fallthru
      _
    // Predicated region
    $region6: #{tpu_custom_call.1} parent=1 // pred_check
      _
    $region7: #{tpu_custom_call.1} parent=1 // pred_check_branch
      %22 = sbr.rel (0) target = $region9
    $region8: #{tpu_custom_call.1} parent=1 // pred_region
      %s24 = ssub.s32 4096, 4096
      %25 = vsyncadd [#allocation6], %s24
      %s26 = sshll.u32 [#allocation5], 4
      %s27 = int_to_ptr.vmem [resolvable:$true] %s26
      %32 = dma.hbm_to_vmem [thread:$0]  %s1, 4096, %s27, [#allocation6], 128, 128, 8
    $region9: #{tpu_custom_call.1} parent=1 // pred_fallthru
      _
    // Predicated region
    $region10: #{tpu_custom_call.1} parent=1 // pred_check
      _
    $region11: #{tpu_custom_call.1} parent=1 // pred_check_branch
      %34 = sbr.rel (0) target = $region13
    $region12: #{tpu_custom_call.1} parent=1 // pred_region
      _
    $region13: #{tpu_custom_call.1} parent=1 // pred_fallthru
      _
    // Predicated region
    $region14: #{tpu_custom_call.1} parent=1 // pred_check
      _
    $region15: #{tpu_custom_call.1} parent=1 // pred_check_branch
      %36 = sbr.rel (0) target = $region17
    $region16: #{tpu_custom_call.1} parent=1 // pred_region
      %37 = dma.done [#allocation3], 64
    $region17: #{tpu_custom_call.1} parent=1 // pred_fallthru
      _
    // Predicated region
    $region18: #{tpu_custom_call.1} parent=1 // pred_check
      _
    $region19: #{tpu_custom_call.1} parent=1 // pred_check_branch
      %39 = sbr.rel (0) target = $region21
    $region20: #{tpu_custom_call.1} parent=1 // pred_region
      %40 = dma.done [#allocation6], 4096
    $region21: #{tpu_custom_call.1} parent=1 // pred_fallthru
      _
    %v41 = vld [vmem:[#allocation2] sm:$0xf]
    %v42 = vld [vmem:[#allocation5] sm:$0xff]
    %v43 = vld [vmem:[#allocation5 + $0x8] sm:$0xff]
    %v44 = vld [vmem:[#allocation5 + $0x10] sm:$0xff]
    %v45 = vld [vmem:[#allocation5 + $0x18] sm:$0xff]
    %v46 = vld [vmem:[#allocation5 + $0x20] sm:$0xff]
    %v47 = vld [vmem:[#allocation5 + $0x28] sm:$0xff]
    %v48 = vld [vmem:[#allocation5 + $0x30] sm:$0xff]
    %v49 = vld [vmem:[#allocation5 + $0x38] sm:$0xff]
    %v50 = vld [vmem:[#allocation5 + $0x40] sm:$0xff]
    %v51 = vld [vmem:[#allocation5 + $0x48] sm:$0xff]
    %v52 = vld [vmem:[#allocation5 + $0x50] sm:$0xff]
    %v53 = vld [vmem:[#allocation5 + $0x58] sm:$0xff]
    %v54 = vld [vmem:[#allocation5 + $0x60] sm:$0xff]
    %v55 = vld [vmem:[#allocation5 + $0x68] sm:$0xff]
    %v56 = vld [vmem:[#allocation5 + $0x70] sm:$0xff]
    %v57 = vld [vmem:[#allocation5 + $0x78] sm:$0xff]
    %v58 = vld [vmem:[#allocation5 + $0x80] sm:$0xff]
    %v59 = vld [vmem:[#allocation5 + $0x88] sm:$0xff]
    %v60 = vld [vmem:[#allocation5 + $0x90] sm:$0xff]
    %v61 = vld [vmem:[#allocation5 + $0x98] sm:$0xff]
    %v62 = vld [vmem:[#allocation5 + $0xa0] sm:$0xff]
    %v63 = vld [vmem:[#allocation5 + $0xa8] sm:$0xff]
    %v64 = vld [vmem:[#allocation5 + $0xb0] sm:$0xff]
    %v65 = vld [vmem:[#allocation5 + $0xb8] sm:$0xff]
    %v66 = vld [vmem:[#allocation5 + $0xc0] sm:$0xff]
    %v67 = vld [vmem:[#allocation5 + $0xc8] sm:$0xff]
    %v68 = vld [vmem:[#allocation5 + $0xd0] sm:$0xff]
    %v69 = vld [vmem:[#allocation5 + $0xd8] sm:$0xff]
    %v70 = vld [vmem:[#allocation5 + $0xe0] sm:$0xff]
    %v71 = vld [vmem:[#allocation5 + $0xe8] sm:$0xff]
    %v72 = vld [vmem:[#allocation5 + $0xf0] sm:$0xff]
    %v73 = vld [vmem:[#allocation5 + $0xf8] sm:$0xff]
    %v74 = vld [vmem:[%s2] sm:$0x1]
    %v76 = vlaneseq
    %v77 = vshrl.u32 %v76, 7
    %v78 = vsub.s32 0, %v77
    %v79 = vrot.slane %v74, %v78
    %v83 = vunpack.c.l.s4 1983009808
    %v84 = vunpack.c.0.s8 %v83
    %v85 = vlaneseq
    %v86 = vshrl.u32 %v85, 7
    %v87 = vsub.s32 %v84, %v86
    %v88 = vrot.slane %v41, %v87
    %v89 = vcombine.high %v88, %v88
    %92 = vmatprep.subr.mxu0 0.0
    %93 = vmatpush1.msra.mxu0 %v42
    %94 = vmatprep.subr.mxu0 0.0
    %95 = vmatpush1.msra.mxu0 %v43
    %96 = vmatprep.subr.mxu0 0.0
    %97 = vmatpush1.msra.mxu0 %v44
    %98 = vmatprep.subr.mxu0 0.0
    %99 = vmatpush1.msra.mxu0 %v45
    %100 = vmatprep.subr.mxu0 0.0
    %101 = vmatpush1.msra.mxu0 %v46
    %102 = vmatprep.subr.mxu0 0.0
    %103 = vmatpush1.msra.mxu0 %v47
    %104 = vmatprep.subr.mxu0 0.0
    %105 = vmatpush1.msra.mxu0 %v48
    %106 = vmatprep.subr.mxu0 0.0
    %107 = vmatpush1.msra.mxu0 %v49
    %108 = vmatprep.subr.mxu0 0.0
    %109 = vmatpush1.msra.mxu0 %v50
    %110 = vmatprep.subr.mxu0 0.0
    %111 = vmatpush1.msra.mxu0 %v51
    %112 = vmatprep.subr.mxu0 0.0
    %113 = vmatpush1.msra.mxu0 %v52
    %114 = vmatprep.subr.mxu0 0.0
    %115 = vmatpush1.msra.mxu0 %v53
    %116 = vmatprep.subr.mxu0 0.0
    %117 = vmatpush1.msra.mxu0 %v54
    %118 = vmatprep.subr.mxu0 0.0
    %119 = vmatpush1.msra.mxu0 %v55
    %120 = vmatprep.subr.mxu0 0.0
    %121 = vmatpush1.msra.mxu0 %v56
    %122 = vmatprep.subr.mxu0 0.0
    %123 = vmatpush1.msra.mxu0 %v57
    %124 = vmatprep.subr.mxu0 0.0
    %125 = vmatpush1.msra.mxu0 %v58
    %126 = vmatprep.subr.mxu0 0.0
    %127 = vmatpush1.msra.mxu0 %v59
    %128 = vmatprep.subr.mxu0 0.0
    %129 = vmatpush1.msra.mxu0 %v60
    %130 = vmatprep.subr.mxu0 0.0
    %131 = vmatpush1.msra.mxu0 %v61
    %132 = vmatprep.subr.mxu0 0.0
    %133 = vmatpush1.msra.mxu0 %v62
    %134 = vmatprep.subr.mxu0 0.0
    %135 = vmatpush1.msra.mxu0 %v63
    %136 = vmatprep.subr.mxu0 0.0
    %137 = vmatpush1.msra.mxu0 %v64
    %138 = vmatprep.subr.mxu0 0.0
    %139 = vmatpush1.msra.mxu0 %v65
    %140 = vmatprep.subr.mxu0 0.0
    %141 = vmatpush1.msra.mxu0 %v66
    %142 = vmatprep.subr.mxu0 0.0
    %143 = vmatpush1.msra.mxu0 %v67
    %144 = vmatprep.subr.mxu0 0.0
    %145 = vmatpush1.msra.mxu0 %v68
    %146 = vmatprep.subr.mxu0 0.0
    %147 = vmatpush1.msra.mxu0 %v69
    %148 = vmatprep.subr.mxu0 0.0
    %149 = vmatpush1.msra.mxu0 %v70
    %150 = vmatprep.subr.mxu0 0.0
    %151 = vmatpush1.msra.mxu0 %v71
    %152 = vmatprep.subr.mxu0 0.0
    %153 = vmatpush1.msra.mxu0 %v72
    %154 = vmatprep.subr.mxu0 0.0
    %155 = vmatpush1.msra.mxu0 %v73
    %156 = vmatprep.mubr.f32.mxu0 %v89
    %157 = vmatmul.mubr.f32.gmra.mrb[0].mxu0 %v88
    %v158 = vpop.f32.mrb[0].mxu0
    %v159 = vadd.f32 %v79, %v158
    %v160 = vpop.f32.mrb[0].mxu0
    %161 = vdwg.mxu0
    %162 = vst [vmem:[#allocation7] sm:$0x3] %v159
    // Predicated region
    $region22: #{tpu_custom_call.1} parent=1 // pred_check
      _
    $region23: #{tpu_custom_call.1} parent=1 // pred_check_branch
      %164 = sbr.rel (0) target = $region25
    $region24: #{tpu_custom_call.1} parent=1 // pred_region
      %s166 = ssub.s32 32, 32
      %167 = vsyncadd [#allocation4], %s166
      %s169 = sshll.u32 [#allocation7], 4
      %s170 = int_to_ptr.vmem [resolvable:$true] %s169
      %172 = dma.vmem_to_hbm [thread:$0]  %s170, 32, %s3, [#allocation4]
    $region25: #{tpu_custom_call.1} parent=1 // pred_fallthru
      _
    // Predicated region
    $region26: #{tpu_custom_call.1} parent=1 // pred_check
      _
    $region27: #{tpu_custom_call.1} parent=1 // pred_check_branch
      %174 = sbr.rel (0) target = $region29
    $region28: #{tpu_custom_call.1} parent=1 // pred_region
      %175 = dma.done [#allocation4], 32
    $region29: #{tpu_custom_call.1} parent=1 // pred_fallthru
      _
    %176 = vsyncpa [#allocation3], 1
    %177 = vsyncpa [#allocation6], 1
    %178 = vsyncpa [#allocation4], 1

</llo_original>
